<compile_context>
chip_gen: v7x
topology: tpu7x:2x2x1
jax: 0.10.0
libtpu: 0.0.40
codegen_flags: <defaults>
</compile_context>

<pallas_src>
import functools

import jax
import jax.numpy as jnp
from jax.experimental import pallas as pl
from jax.experimental.pallas import tpu as pltpu

_LANES = 1024          # wide, lane-dense last dim -> unmasked full-width vst
_NOMINAL_TILE_ROWS = 512  # 512*1024*4B = 2 MiB per f32 buffer (v7x-safe)


def _mask_kernel(x_ref, bits_ref, o_ref, *, threshold):
    # keep element iff its uniform random u32 < threshold  (P[keep] = p)
    keep = bits_ref[...] < jnp.uint32(threshold)
    o_ref[...] = jnp.where(keep, x_ref[...], jnp.zeros_like(x_ref[...]))


def mask_forward(x, *, mask_percentage, key, training=True):
    """Pallas TPU implementation of Mask.forward.

    Eval mode (training=False) is the identity, like the PyTorch module.
    Training mode keeps each element independently with probability
    `mask_percentage` (multiplied by 1.0), otherwise zeroes it.
    """
    if not training:
        return x

    orig_shape = x.shape
    total = x.size

    # Flatten to a lane-dense 2-D slab, padding up so the grid tiles evenly.
    rows = -(-total // _LANES)
    rows = -(-rows // 8) * 8                      # sublane alignment
    if rows <= _NOMINAL_TILE_ROWS:
        tile_rows = rows
    else:
        tile_rows = _NOMINAL_TILE_ROWS
        rows = -(-rows // tile_rows) * tile_rows  # pad to a whole # of tiles
    padded_total = rows * _LANES

    x_flat = x.reshape(-1)
    if padded_total != total:
        x_flat = jnp.pad(x_flat, (0, padded_total - total))
    x2 = x_flat.reshape(rows, _LANES)

    # Uniform random bits for every (padded) element.
    bits = jax.random.bits(key, (rows, _LANES), dtype=jnp.uint32)

    # Integer threshold: P[bits < thr] == mask_percentage (up to 2^-32).
    p = min(max(float(mask_percentage), 0.0), 1.0)
    threshold = min(int(round(p * (1 << 32))), (1 << 32) - 1)

    grid_rows = rows // tile_rows
    kernel = functools.partial(_mask_kernel, threshold=threshold)

    itemsize = jnp.dtype(x.dtype).itemsize
    cost = pl.CostEstimate(
        flops=padded_total,
        transcendentals=0,
        bytes_accessed=padded_total * (2 * itemsize + 4),  # x + out + bits
    )

    out2 = pl.pallas_call(
        kernel,
        out_shape=jax.ShapeDtypeStruct((rows, _LANES), x.dtype),
        grid=(grid_rows,),
        in_specs=[
            pl.BlockSpec((tile_rows, _LANES), lambda i: (i, 0)),  # x tile
            pl.BlockSpec((tile_rows, _LANES), lambda i: (i, 0)),  # bits tile
        ],
        out_specs=pl.BlockSpec((tile_rows, _LANES), lambda i: (i, 0)),
        compiler_params=pltpu.CompilerParams(
            dimension_semantics=("parallel",)),
        cost_estimate=cost,
    )(x2, bits)

    out_flat = out2.reshape(-1)
    if padded_total != total:
        out_flat = out_flat[:total]
    return out_flat.reshape(orig_shape)


if __name__ == "__main__":
    root = jax.random.PRNGKey(0)
    key_x, key_mask = jax.random.split(root)

    # NCHW input, consistent with the PyTorch module's expected usage.
    x = jax.random.normal(key_x, (2, 4, 16, 16), dtype=jnp.float32)
    mask_percentage = 0.5

    # Training-mode forward (the Pallas hot path).
    y_train = mask_forward(x, mask_percentage=mask_percentage, key=key_mask,
                           training=True)
    y_train = jax.block_until_ready(y_train)

    # Eval-mode forward (identity, like the PyTorch module).
    y_eval = mask_forward(x, mask_percentage=mask_percentage, key=key_mask,
                          training=False)
    y_eval = jax.block_until_ready(y_eval)

    # Sanity checks: output is either 0 or equal to x elementwise; eval is x.
    zero_or_same = jnp.all((y_train == 0) | (y_train == x))
    assert bool(zero_or_same), "masked output must be elementwise 0 or x"
    assert bool(jnp.all(y_eval == x)), "eval mode must be identity"
    # Kept fraction should be roughly mask_percentage.
    kept_frac = float(jnp.mean(((y_train == x) & (x != 0)).astype(jnp.float32)))
    assert 0.3 < kept_frac < 0.7, f"unexpected keep fraction {kept_frac}"

    print("KERNEL_OK")
</pallas_src>

<mosaic_0001>
module attributes {stable_mosaic.version = 11 : i64} {
  func.func @_mask_kernel(%arg0: i32, %arg1: memref<8x1024xf32, #tpu.memory_space<vmem>>, %arg2: memref<8x1024xi32, #tpu.memory_space<vmem>>, %arg3: memref<8x1024xf32, #tpu.memory_space<vmem>>) attributes {dimension_semantics = [#tpu.dimension_semantics<parallel>], iteration_bounds = array<i64: 1>, scalar_prefetch = 0 : i64, scratch_operands = 0 : i64, tpu.core_type = #tpu.core_type<tc>, window_params = [{transform_indices = @transform_0, window_bounds = array<i64: 8, 1024>}, {transform_indices = @transform_1, window_bounds = array<i64: 8, 1024>}, {transform_indices = @transform_2, window_bounds = array<i64: 8, 1024>}]} {
    %c0 = arith.constant 0 : index
    %c0_0 = arith.constant 0 : index
    %0 = vector.load %arg2[%c0, %c0_0] : memref<8x1024xi32, #tpu.memory_space<vmem>>, vector<8x1024xi32>
    %c-2147483648_i32 = arith.constant -2147483648 : i32
    %1 = vector.broadcast %c-2147483648_i32 : i32 to vector<8x1024xi32>
    %2 = arith.cmpi ult, %0, %1 : vector<8x1024xi32>
    %c0_1 = arith.constant 0 : index
    %c0_2 = arith.constant 0 : index
    %3 = vector.load %arg1[%c0_1, %c0_2] : memref<8x1024xf32, #tpu.memory_space<vmem>>, vector<8x1024xf32>
    %cst = arith.constant 0.000000e+00 : f32
    %4 = vector.broadcast %cst : f32 to vector<8x1024xf32>
    %5 = arith.select %2, %3, %4 : vector<8x1024xi1>, vector<8x1024xf32>
    %c0_3 = arith.constant 0 : index
    %c0_4 = arith.constant 0 : index
    %6 = vector.load %arg3[%c0_3, %c0_4] : memref<8x1024xf32, #tpu.memory_space<vmem>>, vector<8x1024xf32>
    tpu.vector_store %arg3[%c0_3, %c0_4], %5 {strides = array<i32>} : memref<8x1024xf32, #tpu.memory_space<vmem>>, vector<8x1024xf32>,
    return
  }
  func.func @transform_0(%arg0: i32) -> (i32, i32) {
    %c0_i32 = arith.constant 0 : i32
    %c0_i32_0 = arith.constant 0 : i32
    return %arg0, %c0_i32 : i32, i32
  }
  func.func @transform_1(%arg0: i32) -> (i32, i32) {
    %c0_i32 = arith.constant 0 : i32
    %c0_i32_0 = arith.constant 0 : i32
    return %arg0, %c0_i32 : i32, i32
  }
  func.func @transform_2(%arg0: i32) -> (i32, i32) {
    %c0_i32 = arith.constant 0 : i32
    %c0_i32_0 = arith.constant 0 : i32
    return %arg0, %c0_i32 : i32, i32
  }
}

</mosaic_0001>

<llo_original>
// kernel: tpu_custom_call.1
$region0: #{tpu_custom_call.1}
  #allocation0 [shape = 'u32[]', space=smem, size = 0x4, offset = 0x4, fixed_abs, tag = 'smem constant byte address 0x4 - core index']
  #allocation1 [shape = 'u32[144,128]{1,0:T(1,128)}', space=vmem, size = 0x12000, scoped, tag = 'internal scratch']
  %s0 = inlined_call_operand.hbm [shape: f32[8,1024], index: 0, kind: input, shape index: {}]
  %s1 = inlined_call_operand.hbm [shape: u32[8,1024], index: 1, kind: input, shape index: {}]
  %s2 = inlined_call_operand.hbm [shape: f32[8,1024], index: 2, kind: output, shape index: {}]
  %s3 = sld [smem:[#allocation0]]
  $region26: #{tpu_custom_call.1} parent=0
    _
  %s5 = ssub.s32 1, %s3
  %s6 = scalar_select 0, %s5, %s3
  $region1: #{tpu_custom_call.1} parent=0
    #allocation2 [shape = 'u8[32768]{0}', space=vmem, size = 0x8000, scoped, tag = 'input window, operand 0, single buffered']
    #allocation3 [shape = 's32[1]{0}', space=sflag, size = 0x4, scoped, tag = 'scoped memory for tpu_custom_call.1']
    #allocation4 [shape = 's32[1]{0}', space=sflag, size = 0x4, scoped, tag = 'scoped memory for tpu_custom_call.1']
    #allocation5 [shape = 'u8[32768]{0}', space=vmem, size = 0x8000, scoped, tag = 'input window, operand 1, single buffered']
    #allocation6 [shape = 's32[1]{0}', space=sflag, size = 0x4, scoped, tag = 'scoped memory for tpu_custom_call.1']
    #allocation7 [shape = 'u8[32768]{0}', space=vmem, size = 0x8000, scoped, tag = 'output window, operand 0, single buffered']
    %7 = vsyncpa [#allocation3], 0
    %8 = vsyncpa [#allocation6], 0
    %9 = vsyncpa [#allocation4], 0
    // Predicated region
    $region2: #{tpu_custom_call.1} parent=1 // pred_check
      _
    $region3: #{tpu_custom_call.1} parent=1 // pred_check_branch
      %11 = sbr.rel (0) target = $region5
    $region4: #{tpu_custom_call.1} parent=1 // pred_region
      %s13 = ssub.s32 1024, 1024
      %14 = vsyncadd [#allocation3], %s13
      %s16 = sshll.u32 [#allocation2], 4
      %s17 = int_to_ptr.vmem [resolvable:$true] %s16
      %19 = dma.hbm_to_vmem [thread:$0]  %s0, 1024, %s17, [#allocation3]
    $region5: #{tpu_custom_call.1} parent=1 // pred_fallthru
      _
    // Predicated region
    $region6: #{tpu_custom_call.1} parent=1 // pred_check
      _
    $region7: #{tpu_custom_call.1} parent=1 // pred_check_branch
      %21 = sbr.rel (0) target = $region9
    $region8: #{tpu_custom_call.1} parent=1 // pred_region
      %s23 = ssub.s32 1024, 1024
      %24 = vsyncadd [#allocation6], %s23
      %s26 = sshll.u32 [#allocation5], 4
      %s27 = int_to_ptr.vmem [resolvable:$true] %s26
      %29 = dma.hbm_to_vmem [thread:$0]  %s1, 1024, %s27, [#allocation6]
    $region9: #{tpu_custom_call.1} parent=1 // pred_fallthru
      _
    // Predicated region
    $region10: #{tpu_custom_call.1} parent=1 // pred_check
      _
    $region11: #{tpu_custom_call.1} parent=1 // pred_check_branch
      %31 = sbr.rel (0) target = $region13
    $region12: #{tpu_custom_call.1} parent=1 // pred_region
      %32 = dma.done [#allocation3], 1024
    $region13: #{tpu_custom_call.1} parent=1 // pred_fallthru
      _
    // Predicated region
    $region14: #{tpu_custom_call.1} parent=1 // pred_check
      _
    $region15: #{tpu_custom_call.1} parent=1 // pred_check_branch
      %34 = sbr.rel (0) target = $region17
    $region16: #{tpu_custom_call.1} parent=1 // pred_region
      %35 = dma.done [#allocation6], 1024
    $region17: #{tpu_custom_call.1} parent=1 // pred_fallthru
      _
    %v36 = vld [vmem:[#allocation5] sm:$0xff]
    %v37 = vld [vmem:[#allocation5 + $0x8] sm:$0xff]
    %v38 = vld [vmem:[#allocation5 + $0x10] sm:$0xff]
    %v39 = vld [vmem:[#allocation5 + $0x18] sm:$0xff]
    %v40 = vld [vmem:[#allocation5 + $0x20] sm:$0xff]
    %v41 = vld [vmem:[#allocation5 + $0x28] sm:$0xff]
    %v42 = vld [vmem:[#allocation5 + $0x30] sm:$0xff]
    %v43 = vld [vmem:[#allocation5 + $0x38] sm:$0xff]
    %vm44 = vcmp.lt.u32.totalorder %v36, 2147483648
    %vm45 = vcmp.lt.u32.totalorder %v37, 2147483648
    %vm46 = vcmp.lt.u32.totalorder %v38, 2147483648
    %vm47 = vcmp.lt.u32.totalorder %v39, 2147483648
    %vm48 = vcmp.lt.u32.totalorder %v40, 2147483648
    %vm49 = vcmp.lt.u32.totalorder %v41, 2147483648
    %vm50 = vcmp.lt.u32.totalorder %v42, 2147483648
    %vm51 = vcmp.lt.u32.totalorder %v43, 2147483648
    %v52 = vld [vmem:[#allocation2] sm:$0xff]
    %v53 = vld [vmem:[#allocation2 + $0x8] sm:$0xff]
    %v54 = vld [vmem:[#allocation2 + $0x10] sm:$0xff]
    %v55 = vld [vmem:[#allocation2 + $0x18] sm:$0xff]
    %v56 = vld [vmem:[#allocation2 + $0x20] sm:$0xff]
    %v57 = vld [vmem:[#allocation2 + $0x28] sm:$0xff]
    %v58 = vld [vmem:[#allocation2 + $0x30] sm:$0xff]
    %v59 = vld [vmem:[#allocation2 + $0x38] sm:$0xff]
    %v60 = vsel %vm44, %v52, 0.0
    %v61 = vsel %vm45, %v53, 0.0
    %v62 = vsel %vm46, %v54, 0.0
    %v63 = vsel %vm47, %v55, 0.0
    %v64 = vsel %vm48, %v56, 0.0
    %v65 = vsel %vm49, %v57, 0.0
    %v66 = vsel %vm50, %v58, 0.0
    %v67 = vsel %vm51, %v59, 0.0
    %68 = vst [vmem:[#allocation7] sm:$0xff] %v60
    %69 = vst [vmem:[#allocation7 + $0x8] sm:$0xff] %v61
    %70 = vst [vmem:[#allocation7 + $0x10] sm:$0xff] %v62
    %71 = vst [vmem:[#allocation7 + $0x18] sm:$0xff] %v63
    %72 = vst [vmem:[#allocation7 + $0x20] sm:$0xff] %v64
    %73 = vst [vmem:[#allocation7 + $0x28] sm:$0xff] %v65
    %74 = vst [vmem:[#allocation7 + $0x30] sm:$0xff] %v66
    %75 = vst [vmem:[#allocation7 + $0x38] sm:$0xff] %v67
    // Predicated region
    $region18: #{tpu_custom_call.1} parent=1 // pred_check
      _
    $region19: #{tpu_custom_call.1} parent=1 // pred_check_branch
      %77 = sbr.rel (0) target = $region21
    $region20: #{tpu_custom_call.1} parent=1 // pred_region
      %s79 = ssub.s32 1024, 1024
      %80 = vsyncadd [#allocation4], %s79
      %s82 = sshll.u32 [#allocation7], 4
      %s83 = int_to_ptr.vmem [resolvable:$true] %s82
      %85 = dma.vmem_to_hbm [thread:$0]  %s83, 1024, %s2, [#allocation4]
    $region21: #{tpu_custom_call.1} parent=1 // pred_fallthru
      _
    // Predicated region
    $region22: #{tpu_custom_call.1} parent=1 // pred_check
      _
    $region23: #{tpu_custom_call.1} parent=1 // pred_check_branch
      %87 = sbr.rel (0) target = $region25
    $region24: #{tpu_custom_call.1} parent=1 // pred_region
      %88 = dma.done [#allocation4], 1024
    $region25: #{tpu_custom_call.1} parent=1 // pred_fallthru
      _
    %89 = vsyncpa [#allocation3], 1
    %90 = vsyncpa [#allocation6], 1
    %91 = vsyncpa [#allocation4], 1

</llo_original>
